<compile_context>
chip_gen: v7x
topology: tpu7x:2x2x1
jax: 0.10.0
libtpu: 0.0.40
codegen_flags: <defaults>
</compile_context>

<pallas_src>
import functools

import jax
import jax.numpy as jnp
from jax.experimental import pallas as pl
from jax.experimental.pallas import tpu as pltpu

_LANE = 128
_EPS = 1e-8
# Keep a single (C, tile) block at/below this so double-buffered in+out (4
# copies) plus f32 temps fit every generation's VMEM.
_BLOCK_BYTE_BUDGET = 4 * 1024 * 1024
# If a whole sample (f32 footprint) fits under this, use the one-read path.
_SAMPLE_BLOCK_BYTES = 4 * 1024 * 1024


def _gln_sample_kernel(x_ref, gamma_ref, beta_ref, o_ref, *, inv_n):
    """One full sample per grid step. x: (1, C, FT); gamma/beta: (1, C, 1)."""
    x = x_ref[...].astype(jnp.float32)                       # (1, C, FT)

    # Single traversal: sum and sum of squares (lane reduce -> sublane reduce).
    s = jnp.sum(x, axis=2, keepdims=True)                    # (1, C, 1)
    sq = jnp.sum(x * x, axis=2, keepdims=True)
    total = jnp.sum(s, axis=1, keepdims=True)                # (1, 1, 1)
    total_sq = jnp.sum(sq, axis=1, keepdims=True)

    mean = total * inv_n
    var = jnp.maximum(total_sq * inv_n - mean * mean, 0.0)
    inv_std = jax.lax.rsqrt(var + _EPS)

    gamma = gamma_ref[...].astype(jnp.float32)                # (1, C, 1)
    beta = beta_ref[...].astype(jnp.float32)
    a = gamma * inv_std                                       # per-channel scale
    b = beta - mean * a                                       # per-channel shift
    o_ref[...] = (x * a + b).astype(o_ref.dtype)


def _gln_tiled_kernel(x_ref, gamma_ref, beta_ref, o_ref,
                      sum_ref, sq_ref, a_ref, b_ref,
                      *, inv_n, ft, tile, needs_mask):
    """Two-phase kernel: phase 0 accumulates stats, phase 1 applies fused FMA."""
    p = pl.program_id(1)
    t = pl.program_id(2)
    nt = pl.num_programs(2)

    @pl.when((p == 0) & (t == 0))
    def _init():
        sum_ref[...] = jnp.zeros_like(sum_ref)
        sq_ref[...] = jnp.zeros_like(sq_ref)

    @pl.when(p == 0)
    def _stats():
        x = x_ref[...].astype(jnp.float32)                    # (1, C, tile)
        if needs_mask:
            lane = jax.lax.broadcasted_iota(jnp.int32, x.shape, 2)
            x = jnp.where(t * tile + lane < ft, x, 0.0)       # zero OOB lanes
        sum_ref[...] += jnp.sum(x, axis=2, keepdims=True)     # (1, C, 1)
        sq_ref[...] += jnp.sum(x * x, axis=2, keepdims=True)

    @pl.when((p == 0) & (t == nt - 1))
    def _finalize():
        # Fold the scalar stats and the affine params into per-channel a, b
        # ONCE per sample, so every apply tile is just a streaming FMA.
        total = jnp.sum(sum_ref[...])
        total_sq = jnp.sum(sq_ref[...])
        mean = total * inv_n
        var = jnp.maximum(total_sq * inv_n - mean * mean, 0.0)
        inv_std = jax.lax.rsqrt(var + _EPS)
        gamma = gamma_ref[...].astype(jnp.float32)             # (1, C, 1)
        beta = beta_ref[...].astype(jnp.float32)
        a = gamma * inv_std
        a_ref[...] = a
        b_ref[...] = beta - mean * a

    @pl.when(p == 1)
    def _apply():
        x = x_ref[...].astype(jnp.float32)                     # (1, C, tile)
        o_ref[...] = (x * a_ref[...] + b_ref[...]).astype(o_ref.dtype)


def _pick_tile(ft, c, itemsize, max_tile):
    budget_elems = _BLOCK_BYTE_BUDGET // max(itemsize, 1)
    tile = (budget_elems // max(c, 1)) // _LANE * _LANE
    tile = max(_LANE, min(tile, max_tile))
    if ft <= tile:
        return ft          # one full-axis block (always layout-legal)
    return tile             # multiple of 128 -> lane-dense blocks


def gln_forward(x, gamma, beta, *, force_tiled=False, tile_ft=None, max_tile=2048):
    """Global LayerNorm. x: (B, C, F, T); gamma, beta: (1, C, 1, 1)."""
    B, C, F, T = x.shape
    ft = F * T
    inv_n = 1.0 / float(C * ft)
    itemsize = x.dtype.itemsize

    # Lane-dense layout: collapse (F, T) into one last axis (free, contiguous).
    x3 = x.reshape(B, C, ft)
    g3 = gamma.reshape(1, C, 1)
    b3 = beta.reshape(1, C, 1)

    sample_f32_bytes = C * ft * 4
    use_sample_path = (not force_tiled) and (sample_f32_bytes <= _SAMPLE_BLOCK_BYTES)

    if use_sample_path:
        vmem_limit = int(min(48 * 1024 * 1024,
                             max(16 * 1024 * 1024, 8 * sample_f32_bytes + (2 << 20))))
        out3 = pl.pallas_call(
            functools.partial(_gln_sample_kernel, inv_n=inv_n),
            out_shape=jax.ShapeDtypeStruct((B, C, ft), x.dtype),
            grid_spec=pltpu.PrefetchScalarGridSpec(
                num_scalar_prefetch=0,
                grid=(B,),
                in_specs=[
                    pl.BlockSpec((1, C, ft), lambda b: (b, 0, 0)),
                    pl.BlockSpec((1, C, 1), lambda b: (0, 0, 0)),
                    pl.BlockSpec((1, C, 1), lambda b: (0, 0, 0)),
                ],
                out_specs=pl.BlockSpec((1, C, ft), lambda b: (b, 0, 0)),
            ),
            compiler_params=pltpu.CompilerParams(
                dimension_semantics=("parallel",),
                vmem_limit_bytes=vmem_limit,
            ),
        )(x3, g3, b3)
        return out3.reshape(B, C, F, T)

    tile = int(tile_ft) if tile_ft is not None else _pick_tile(ft, C, itemsize, max_tile)
    tile = min(tile, ft)
    nt = pl.cdiv(ft, tile)
    needs_mask = (ft % tile) != 0

    block_bytes = C * tile * itemsize
    # Explicit scoped-VMEM budget: double-buffered in+out + f32 temps + headroom.
    vmem_limit = int(min(48 * 1024 * 1024,
                         max(16 * 1024 * 1024, 8 * block_bytes + (2 << 20))))

    out3 = pl.pallas_call(
        functools.partial(_gln_tiled_kernel, inv_n=inv_n, ft=ft, tile=tile,
                          needs_mask=needs_mask),
        out_shape=jax.ShapeDtypeStruct((B, C, ft), x.dtype),
        grid_spec=pltpu.PrefetchScalarGridSpec(
            num_scalar_prefetch=0,
            grid=(B, 2, nt),                                  # (sample, phase, tile)
            in_specs=[
                pl.BlockSpec((1, C, tile), lambda b, p, t: (b, 0, t)),
                pl.BlockSpec((1, C, 1), lambda b, p, t: (0, 0, 0)),
                pl.BlockSpec((1, C, 1), lambda b, p, t: (0, 0, 0)),
            ],
            # During the stats phase (p == 0) the output block index is pinned
            # to (b, 0, 0), so no unwritten block is ever flushed; the apply
            # phase (p == 1) walks the tiles and fully overwrites each block
            # before write-back (lane-dense, unmasked stores).
            out_specs=pl.BlockSpec((1, C, tile), lambda b, p, t: (b, 0, t * p)),
            scratch_shapes=[
                pltpu.VMEM((1, C, 1), jnp.float32),   # running per-channel sum
                pltpu.VMEM((1, C, 1), jnp.float32),   # running per-channel sum of squares
                pltpu.VMEM((1, C, 1), jnp.float32),   # finalized per-channel scale a
                pltpu.VMEM((1, C, 1), jnp.float32),   # finalized per-channel shift b
            ],
        ),
        compiler_params=pltpu.CompilerParams(
            dimension_semantics=("parallel", "arbitrary", "arbitrary"),
            vmem_limit_bytes=vmem_limit,
        ),
    )(x3, g3, b3)
    return out3.reshape(B, C, F, T)


def gln_reference(x, gamma, beta):
    xf = x.astype(jnp.float32)
    mean = jnp.mean(xf, axis=(1, 2, 3), keepdims=True)
    var = jnp.mean((xf - mean) ** 2, axis=(1, 2, 3), keepdims=True)
    out = (xf - mean) / jnp.sqrt(var + _EPS) * gamma.astype(jnp.float32) \
        + beta.astype(jnp.float32)
    return out.astype(x.dtype)


if __name__ == "__main__":
    # --- required test shape (takes the per-sample, single-read path) ---
    key = jax.random.PRNGKey(0)
    B, C, F, T = 2, 4, 16, 16
    x = jax.random.normal(key, (B, C, F, T), dtype=jnp.float32)
    # Deterministic parameter init, exactly as in the module's __init__:
    gamma = jnp.ones((1, C, 1, 1), dtype=jnp.float32)
    beta = jnp.zeros((1, C, 1, 1), dtype=jnp.float32)

    out = jax.block_until_ready(gln_forward(x, gamma, beta))
    ref = gln_reference(x, gamma, beta)
    assert out.shape == (B, C, F, T)
    assert jnp.allclose(out, ref, atol=1e-5, rtol=1e-5), "sample-path mismatch"

    # --- tiled two-phase path (multi-tile, exact division) ---
    out_t = jax.block_until_ready(
        gln_forward(x, gamma, beta, force_tiled=True, tile_ft=128))
    assert jnp.allclose(out_t, ref, atol=1e-5, rtol=1e-5), "tiled-path mismatch"

    # --- tiled path with a remainder tile (masked stats) + non-trivial affine ---
    k1, k2, k3 = jax.random.split(jax.random.PRNGKey(1), 3)
    B2, C2, F2, T2 = 2, 8, 10, 20            # F*T = 200 -> one 128-tile + remainder
    x2 = jax.random.normal(k1, (B2, C2, F2, T2), dtype=jnp.float32)
    g2 = 1.0 + 0.1 * jax.random.normal(k2, (1, C2, 1, 1), dtype=jnp.float32)
    b2 = 0.1 * jax.random.normal(k3, (1, C2, 1, 1), dtype=jnp.float32)
    out2 = jax.block_until_ready(
        gln_forward(x2, g2, b2, force_tiled=True, tile_ft=128))
    ref2 = gln_reference(x2, g2, b2)
    assert jnp.allclose(out2, ref2, atol=1e-5, rtol=1e-5), "masked-tile mismatch"

    print("KERNEL_OK")
</pallas_src>

<mosaic_0001>
module attributes {stable_mosaic.version = 11 : i64} {
  func.func @_gln_sample_kernel(%arg0: i32, %arg1: memref<1x4x256xf32, #tpu.memory_space<vmem>>, %arg2: memref<1x4x1xf32, #tpu.memory_space<vmem>>, %arg3: memref<1x4x1xf32, #tpu.memory_space<vmem>>, %arg4: memref<1x4x256xf32, #tpu.memory_space<vmem>>) attributes {dimension_semantics = [#tpu.dimension_semantics<parallel>], iteration_bounds = array<i64: 2>, scalar_prefetch = 0 : i64, scratch_operands = 0 : i64, tpu.core_type = #tpu.core_type<tc>, window_params = [{transform_indices = @transform_0, window_bounds = array<i64: 1, 4, 256>}, {pipeline_mode = #tpu.pipeline_mode<synchronous>, transform_indices = @transform_1, window_bounds = array<i64: 1, 4, 1>}, {pipeline_mode = #tpu.pipeline_mode<synchronous>, transform_indices = @transform_2, window_bounds = array<i64: 1, 4, 1>}, {transform_indices = @transform_3, window_bounds = array<i64: 1, 4, 256>}]} {
    %c0 = arith.constant 0 : index
    %c0_0 = arith.constant 0 : index
    %c0_1 = arith.constant 0 : index
    %0 = vector.load %arg1[%c0, %c0_0, %c0_1] : memref<1x4x256xf32, #tpu.memory_space<vmem>>, vector<1x4x256xf32>
    %cst = arith.constant dense<0.000000e+00> : vector<1x4xf32>
    %1 = vector.multi_reduction <add>, %0, %cst [2] : vector<1x4x256xf32> to vector<1x4xf32>
    %2 = vector.shape_cast %1 : vector<1x4xf32> to vector<1x4x1xf32>
    %3 = arith.mulf %0, %0 : vector<1x4x256xf32>
    %cst_2 = arith.constant dense<0.000000e+00> : vector<1x4xf32>
    %4 = vector.multi_reduction <add>, %3, %cst_2 [2] : vector<1x4x256xf32> to vector<1x4xf32>
    %5 = vector.shape_cast %4 : vector<1x4xf32> to vector<1x4x1xf32>
    %cst_3 = arith.constant dense<0.000000e+00> : vector<1x1xf32>
    %6 = vector.multi_reduction <add>, %2, %cst_3 [1] : vector<1x4x1xf32> to vector<1x1xf32>
    %7 = vector.shape_cast %6 : vector<1x1xf32> to vector<1x1x1xf32>
    %cst_4 = arith.constant dense<0.000000e+00> : vector<1x1xf32>
    %8 = vector.multi_reduction <add>, %5, %cst_4 [1] : vector<1x4x1xf32> to vector<1x1xf32>
    %9 = vector.shape_cast %8 : vector<1x1xf32> to vector<1x1x1xf32>
    %cst_5 = arith.constant 9.765625E-4 : f32
    %10 = vector.broadcast %cst_5 : f32 to vector<1x1x1xf32>
    %11 = arith.mulf %7, %10 : vector<1x1x1xf32>
    %cst_6 = arith.constant 9.765625E-4 : f32
    %12 = vector.broadcast %cst_6 : f32 to vector<1x1x1xf32>
    %13 = arith.mulf %9, %12 : vector<1x1x1xf32>
    %14 = arith.mulf %11, %11 : vector<1x1x1xf32>
    %15 = arith.subf %13, %14 : vector<1x1x1xf32>
    %cst_7 = arith.constant 0.000000e+00 : f32
    %16 = vector.broadcast %cst_7 : f32 to vector<1x1x1xf32>
    %17 = arith.maximumf %15, %16 : vector<1x1x1xf32>
    %cst_8 = arith.constant 9.99999993E-9 : f32
    %18 = vector.broadcast %cst_8 : f32 to vector<1x1x1xf32>
    %19 = arith.addf %17, %18 : vector<1x1x1xf32>
    %20 = math.rsqrt %19 : vector<1x1x1xf32>
    %c0_9 = arith.constant 0 : index
    %c0_10 = arith.constant 0 : index
    %c0_11 = arith.constant 0 : index
    %21 = vector.load %arg2[%c0_9, %c0_10, %c0_11] : memref<1x4x1xf32, #tpu.memory_space<vmem>>, vector<1x4x1xf32>
    %c0_12 = arith.constant 0 : index
    %c0_13 = arith.constant 0 : index
    %c0_14 = arith.constant 0 : index
    %22 = vector.load %arg3[%c0_12, %c0_13, %c0_14] : memref<1x4x1xf32, #tpu.memory_space<vmem>>, vector<1x4x1xf32>
    %23 = vector.broadcast %20 : vector<1x1x1xf32> to vector<1x4x1xf32>
    %24 = arith.mulf %21, %23 : vector<1x4x1xf32>
    %25 = vector.broadcast %11 : vector<1x1x1xf32> to vector<1x4x1xf32>
    %26 = arith.mulf %25, %24 : vector<1x4x1xf32>
    %27 = arith.subf %22, %26 : vector<1x4x1xf32>
    %28 = vector.broadcast %24 : vector<1x4x1xf32> to vector<1x4x256xf32>
    %29 = arith.mulf %0, %28 : vector<1x4x256xf32>
    %30 = vector.broadcast %27 : vector<1x4x1xf32> to vector<1x4x256xf32>
    %31 = arith.addf %29, %30 : vector<1x4x256xf32>
    %c0_15 = arith.constant 0 : index
    %c0_16 = arith.constant 0 : index
    %c0_17 = arith.constant 0 : index
    %32 = vector.load %arg4[%c0_15, %c0_16, %c0_17] : memref<1x4x256xf32, #tpu.memory_space<vmem>>, vector<1x4x256xf32>
    tpu.vector_store %arg4[%c0_15, %c0_16, %c0_17], %31 {strides = array<i32>} : memref<1x4x256xf32, #tpu.memory_space<vmem>>, vector<1x4x256xf32>,
    return
  }
  func.func @transform_0(%arg0: i32) -> (i32, i32, i32) {
    %c0_i32 = arith.constant 0 : i32
    %c0_i32_0 = arith.constant 0 : i32
    %c0_i32_1 = arith.constant 0 : i32
    return %arg0, %c0_i32, %c0_i32_0 : i32, i32, i32
  }
  func.func @transform_1(%arg0: i32) -> (i32, i32, i32) {
    %c0_i32 = arith.constant 0 : i32
    %c0_i32_0 = arith.constant 0 : i32
    %c0_i32_1 = arith.constant 0 : i32
    %c0_i32_2 = arith.constant 0 : i32
    return %c0_i32, %c0_i32_0, %c0_i32_1 : i32, i32, i32
  }
  func.func @transform_2(%arg0: i32) -> (i32, i32, i32) {
    %c0_i32 = arith.constant 0 : i32
    %c0_i32_0 = arith.constant 0 : i32
    %c0_i32_1 = arith.constant 0 : i32
    %c0_i32_2 = arith.constant 0 : i32
    return %c0_i32, %c0_i32_0, %c0_i32_1 : i32, i32, i32
  }
  func.func @transform_3(%arg0: i32) -> (i32, i32, i32) {
    %c0_i32 = arith.constant 0 : i32
    %c0_i32_0 = arith.constant 0 : i32
    %c0_i32_1 = arith.constant 0 : i32
    return %arg0, %c0_i32, %c0_i32_0 : i32, i32, i32
  }
}

</mosaic_0001>

<llo_original>
// kernel: tpu_custom_call.1
$region0: #{tpu_custom_call.1}
  #allocation0 [shape = 'u32[]', space=smem, size = 0x4, offset = 0x4, fixed_abs, tag = 'smem constant byte address 0x4 - core index']
  #allocation1 [shape = 'u32[144,128]{1,0:T(1,128)}', space=vmem, size = 0x12000, scoped, tag = 'internal scratch']
  %s0 = inlined_call_operand.hbm [shape: f32[2,4,256], index: 0, kind: input, shape index: {}]
  %s1 = inlined_call_operand.vmem [shape: f32[1,4,1], index: 1, kind: input, shape index: {}]
  %s2 = inlined_call_operand.vmem [shape: f32[1,4,1], index: 2, kind: input, shape index: {}]
  %s3 = inlined_call_operand.hbm [shape: f32[2,4,256], index: 3, kind: output, shape index: {}]
  %s4 = sld [smem:[#allocation0]]
  $region49: #{tpu_custom_call.1} parent=0
    _
  %s6 = ssub.s32 1, %s4
  %s7 = scalar_select 0, %s6, %s4
  $region1: #{tpu_custom_call.1} parent=0
    #allocation2 [shape = 'u8[8192]{0}', space=vmem, size = 0x2000, scoped, tag = 'input window, operand 0']
    #allocation3 [shape = 's32[2]{0}', space=sflag, size = 0x8, scoped, tag = 'scoped memory for tpu_custom_call.1']
    #allocation4 [shape = 's32[2]{0}', space=sflag, size = 0x8, scoped, tag = 'scoped memory for tpu_custom_call.1']
    #allocation5 [shape = 'u8[8192]{0}', space=vmem, size = 0x2000, scoped, tag = 'output window, operand 0']
    %8 = vsyncpa [#allocation3], 0
    %s9 = scalar_lea.sflag [#allocation3], 1
    %10 = vsyncpa %s9, 0
    %11 = vsyncpa [#allocation4], 0
    %s12 = scalar_lea.sflag [#allocation4], 1
    %13 = vsyncpa %s12, 0
    loop: start=0, step=1, limit=4
    $region2: #{tpu_custom_call.1} parent=1 // loop_pre_header
      _
    $region3: #{tpu_custom_call.1} parent=1 // loop_header
      %s15 = sphi 0, %s19
      %p16 = scmp.ge.s32.totalorder %s15, 4
      %s25 = sphi 0, %s27
      %s28 = sphi 0, %s25
      %s29 = sphi 0, %s28
      %s45 = sphi 0, %s29
      %s49 = sphi 0, %s49
      %s51 = sphi 0, %s49
      %s52 = sphi 0, %s51
      %s66 = sphi 0, %s52
      %s70 = sphi 0, %s70
      %s72 = sphi 0, %s70
      %s73 = sphi 0, %s72
      %s87 = sphi 0, %s73
      %s93 = sphi 0, %s95
      %s96 = sphi 0, %s93
      %s97 = sphi 0, %s96
      %s113 = sphi 0, %s97
    $region4: #{tpu_custom_call.1} parent=1 // loop_header_branch
      %18 = sbr.rel (%p16) target = $region8
    $region5: #{tpu_custom_call.1} parent=1 // loop_body
      %s20 = ssub.s32 %s15, 1
      %s21 = ssub.s32 %s15, 2
      %s22 = sadd.s32 %s15, 1
      %s23 = ssub.s32 %s15, %s22
      %p24 = scmp.eq.s32.totalorder %s23, 0
      %s26 = sadd.s32 %s25, 1
      %s27 = scalar_select %p24, %s25, %s26
      %p30 = pneg %p24
      %p31 = scmp.eq.s32.totalorder %s15, 1
      %p32 = por %p30, %p31
      %p33 = scmp.ne.s32.totalorder %s25, %s28
      %p34 = scmp.eq.s32.totalorder %s15, 0
      %p35 = por %p33, %p34
      %p36 = scmp.ne.s32.totalorder %s25, %s28
      %p37 = scmp.eq.s32.totalorder %s20, 1
      %p38 = por %p36, %p37
      %p39 = scmp.ne.s32.totalorder %s28, %s29
      %p40 = scmp.eq.s32.totalorder %s20, 0
      %p41 = por %p39, %p40
      %p42 = scmp.ne.s32.totalorder %s28, %s29
      %p43 = scmp.eq.s32.totalorder %s21, 1
      %p44 = por %p42, %p43
      %p46 = scmp.ne.s32.totalorder %s29, %s45
      %p47 = scmp.eq.s32.totalorder %s21, 0
      %p48 = por %p46, %p47
      %s50 = sadd.s32 %s49, 1
      %p53 = scmp.eq.s32.totalorder %s15, 1
      %p54 = scmp.ne.s32.totalorder %s49, %s51
      %p55 = scmp.eq.s32.totalorder %s15, 0
      %p56 = por %p54, %p55
      %p57 = scmp.ne.s32.totalorder %s49, %s51
      %p58 = scmp.eq.s32.totalorder %s20, 1
      %p59 = por %p57, %p58
      %p60 = scmp.ne.s32.totalorder %s51, %s52
      %p61 = scmp.eq.s32.totalorder %s20, 0
      %p62 = por %p60, %p61
      %p63 = scmp.ne.s32.totalorder %s51, %s52
      %p64 = scmp.eq.s32.totalorder %s21, 1
      %p65 = por %p63, %p64
      %p67 = scmp.ne.s32.totalorder %s52, %s66
      %p68 = scmp.eq.s32.totalorder %s21, 0
      %p69 = por %p67, %p68
      %s71 = sadd.s32 %s70, 1
      %p74 = scmp.eq.s32.totalorder %s15, 1
      %p75 = scmp.ne.s32.totalorder %s70, %s72
      %p76 = scmp.eq.s32.totalorder %s15, 0
      %p77 = por %p75, %p76
      %p78 = scmp.ne.s32.totalorder %s70, %s72
      %p79 = scmp.eq.s32.totalorder %s20, 1
      %p80 = por %p78, %p79
      %p81 = scmp.ne.s32.totalorder %s72, %s73
      %p82 = scmp.eq.s32.totalorder %s20, 0
      %p83 = por %p81, %p82
      %p84 = scmp.ne.s32.totalorder %s72, %s73
      %p85 = scmp.eq.s32.totalorder %s21, 1
      %p86 = por %p84, %p85
      %p88 = scmp.ne.s32.totalorder %s73, %s87
      %p89 = scmp.eq.s32.totalorder %s21, 0
      %p90 = por %p88, %p89
      %s91 = ssub.s32 %s15, %s22
      %p92 = scmp.eq.s32.totalorder %s91, 0
      %s94 = sadd.s32 %s93, 1
      %s95 = scalar_select %p92, %s93, %s94
      %p98 = pneg %p92
      %p99 = scmp.eq.s32.totalorder %s15, 1
      %p100 = por %p98, %p99
      %p101 = scmp.ne.s32.totalorder %s93, %s96
      %p102 = scmp.eq.s32.totalorder %s15, 0
      %p103 = por %p101, %p102
      %p104 = scmp.ne.s32.totalorder %s93, %s96
      %p105 = scmp.eq.s32.totalorder %s20, 1
      %p106 = por %p104, %p105
      %p107 = scmp.ne.s32.totalorder %s96, %s97
      %p108 = scmp.eq.s32.totalorder %s20, 0
      %p109 = por %p107, %p108
      %p110 = scmp.ne.s32.totalorder %s96, %s97
      %p111 = scmp.eq.s32.totalorder %s21, 1
      %p112 = por %p110, %p111
      %p114 = scmp.ne.s32.totalorder %s97, %s113
      %p115 = scmp.eq.s32.totalorder %s21, 0
      %p116 = por %p114, %p115
      %p117 = scmp.le.s32.totalorder 1, %s15
      %p118 = scmp.lt.s32.totalorder %s15, 3
      %p119 = pnand %p117, %p118
      %p120 = pneg %p119
      // Predicated region
      $region9: #{tpu_custom_call.1} parent=5 // pred_check
        _
      $region10: #{tpu_custom_call.1} parent=5 // pred_check_branch
        %122 = sbr.rel (%p119) target = $region12
      $region11: #{tpu_custom_call.1} parent=5 // pred_region
        %s123 = ssub.s32 %s15, 1
        // Predicated region
        $region13: #{tpu_custom_call.1} parent=11 // pred_check
          %p124 = pneg %p62
        $region14: #{tpu_custom_call.1} parent=11 // pred_check_branch
          %126 = sbr.rel (%p124) target = $region16
        $region15: #{tpu_custom_call.1} parent=11 // pred_region
          _
        $region16: #{tpu_custom_call.1} parent=11 // pred_fallthru
          _
        // Predicated region
        $region17: #{tpu_custom_call.1} parent=11 // pred_check
          %p127 = pneg %p83
        $region18: #{tpu_custom_call.1} parent=11 // pred_check_branch
          %129 = sbr.rel (%p127) target = $region20
        $region19: #{tpu_custom_call.1} parent=11 // pred_region
          _
        $region20: #{tpu_custom_call.1} parent=11 // pred_fallthru
          _
      $region12: #{tpu_custom_call.1} parent=5 // pred_fallthru
        _
      %p130 = scmp.lt.s32.totalorder %s15, 2
      // Predicated region
      $region21: #{tpu_custom_call.1} parent=5 // pred_check
        %p131 = pneg %p130
      $region22: #{tpu_custom_call.1} parent=5 // pred_check_branch
        %133 = sbr.rel (%p131) target = $region24
      $region23: #{tpu_custom_call.1} parent=5 // pred_region
        // Predicated region
        $region25: #{tpu_custom_call.1} parent=23 // pred_check
          %p134 = pneg %p35
        $region26: #{tpu_custom_call.1} parent=23 // pred_check_branch
          %136 = sbr.rel (%p134) target = $region28
        $region27: #{tpu_custom_call.1} parent=23 // pred_region
          %s137 = sand.u32 %s25, 1
          %s138 = scalar_lea.sflag [#allocation3], %s137
          %s139 = sand.u32 %s25, 1
          %s140 = smul.addr %s139, 8
          %s141 = scalar_lea.vmem [#allocation2], %s140
          %s143 = ssub.s32 128, 128
          %144 = vsyncadd %s138, %s143
          %s145 = smul.addr %s15, 2
          %s146 = smul.addr %s145, 64
          %s147 = scalar_lea.hbm %s0, %s146
          %s149 = sshll.u32 %s141, 4
          %s150 = int_to_ptr.vmem [resolvable:$true] %s149
          %152 = dma.hbm_to_vmem [thread:$0]  %s147, 128, %s150, %s138
        $region28: #{tpu_custom_call.1} parent=23 // pred_fallthru
          _
      $region24: #{tpu_custom_call.1} parent=5 // pred_fallthru
        _
      %p153 = scmp.le.s32.totalorder 1, %s15
      %p154 = scmp.lt.s32.totalorder %s15, 3
      %p155 = pnand %p153, %p154
      %p156 = pneg %p155
      // Predicated region
      $region29: #{tpu_custom_call.1} parent=5 // pred_check
        _
      $region30: #{tpu_custom_call.1} parent=5 // pred_check_branch
        %158 = sbr.rel (%p155) target = $region32
      $region31: #{tpu_custom_call.1} parent=5 // pred_region
        %s159 = ssub.s32 %s15, 1
        %s160 = sand.u32 %s28, 1
        %s161 = scalar_lea.sflag [#allocation3], %s160
        %s162 = sand.u32 %s28, 1
        %s163 = smul.addr %s162, 8
        %s164 = scalar_lea.vmem [#allocation2], %s163
        // Predicated region
        $region33: #{tpu_custom_call.1} parent=31 // pred_check
          %p165 = pneg %p41
        $region34: #{tpu_custom_call.1} parent=31 // pred_check_branch
          %167 = sbr.rel (%p165) target = $region36
        $region35: #{tpu_custom_call.1} parent=31 // pred_region
          %168 = dma.done %s161, 128
        $region36: #{tpu_custom_call.1} parent=31 // pred_fallthru
          _
        %s169 = sand.u32 %s28, 1
        %s170 = scalar_lea.sflag [#allocation3], %s169
        %s171 = sand.u32 %s28, 1
        %s172 = smul.addr %s171, 8
        %s173 = scalar_lea.vmem [#allocation2], %s172
        %p174 = pneg %p41
        %p175 = pneg %p38
        %p176 = pneg %p62
        %p177 = pneg %p59
        %p178 = pneg %p83
        %p179 = pneg %p80
        %p180 = pneg %p109
        %p181 = pneg %p106
        %s182 = sand.u32 %s96, 1
        %s183 = scalar_lea.sflag [#allocation4], %s182
        %s184 = sand.u32 %s96, 1
        %s185 = smul.addr %s184, 8
        %s186 = scalar_lea.vmem [#allocation5], %s185
        %v187 = vld [vmem:[%s164] sm:$0xff]
        %v189 = vcombine.high %v187, %v187
        %vm191 = vcmask 1043456
        %v192 = vsel %vm191, %v187, 0.0
        %v193 = vsel %vm191, %v189, 0.0
        %v194 = vadd.f32 %v192, %v193
        %195 = vadd.xlane.f32.xlu0 %v194
        %v196 = vpop.xlane.xlu0 %195
        %v197 = vmul.f32 %v187, %v187
        %v199 = vcombine.high %v197, %v197
        %v201 = vsel %vm191, %v197, 0.0
        %v202 = vsel %vm191, %v199, 0.0
        %v203 = vadd.f32 %v201, %v202
        %204 = vadd.xlane.f32.xlu0 %v203
        %v205 = vpop.xlane.xlu0 %204
        %v206 = vsel %vm191, %v196, 0.0
        %v207 = vrot.slane %v206, 4
        %v208 = vadd.f32 %v206, %v207
        %v209 = vrot.slane %v208, 2
        %v210 = vadd.f32 %v208, %v209
        %v211 = vrot.slane %v210, 1
        %v212 = vadd.f32 %v210, %v211
        %v213 = vsel %vm191, %v205, 0.0
        %v214 = vrot.slane %v213, 4
        %v215 = vadd.f32 %v213, %v214
        %v216 = vrot.slane %v215, 2
        %v217 = vadd.f32 %v215, %v216
        %v218 = vrot.slane %v217, 1
        %v219 = vadd.f32 %v217, %v218
        %v220 = vmul.f32 %v212, 0.0009765625
        %v221 = vmul.f32 %v219, 0.0009765625
        %v222 = vmul.f32 %v220, %v220
        %v223 = vsub.f32 %v221, %v222
        %v224 = vmax.f32 %v223, 0.0
        %v225 = vadd.f32 %v224, 1e-08
        %v226 = vrsqrt.pop %v225
        %v227 = vld [vmem:[%s1] sm:$0xf]
        %v228 = vld [vmem:[%s2] sm:$0xf]
        %v229 = vmul.f32 %v227, %v226
        %v230 = vmul.f32 %v220, %v229
        %v231 = vsub.f32 %v228, %v230
        %233 = vset.pattern.permute.xlu0 0
        %234 = vperm.xlu0 %233, %v229
        %v235 = vpop.permute.xlu0 %234
        %v237 = vunpack.c.l.s4 839922192
        %v238 = vunpack.c.0.s8 %v237
        %v239 = vlaneseq
        %v240 = vshrl.u32 %v239, 7
        %v241 = vsub.s32 %v238, %v240
        %v242 = vrot.slane %v235, %v241
        %v244 = vmul.f32 %v187, %v242
        %246 = vset.pattern.permute.xlu0 0
        %247 = vperm.xlu0 %246, %v231
        %v248 = vpop.permute.xlu0 %247
        %v250 = vunpack.c.l.s4 839922192
        %v251 = vunpack.c.0.s8 %v250
        %v252 = vlaneseq
        %v253 = vshrl.u32 %v252, 7
        %v254 = vsub.s32 %v251, %v253
        %v255 = vrot.slane %v248, %v254
        %v257 = vadd.f32 %v244, %v255
        %258 = vst [vmem:[%s186] sm:$0xff] %v257
        %s259 = sand.u32 %s96, 1
        %s260 = scalar_lea.sflag [#allocation4], %s259
        %s261 = sand.u32 %s96, 1
        %s262 = smul.addr %s261, 8
        %s263 = scalar_lea.vmem [#allocation5], %s262
        // Predicated region
        $region37: #{tpu_custom_call.1} parent=31 // pred_check
          %p264 = pneg %p106
        $region38: #{tpu_custom_call.1} parent=31 // pred_check_branch
          %266 = sbr.rel (%p264) target = $region40
        $region39: #{tpu_custom_call.1} parent=31 // pred_region
          %s268 = ssub.s32 128, 128
          %269 = vsyncadd %s260, %s268
          %s270 = smul.addr %s20, 2
          %s271 = smul.addr %s270, 64
          %s272 = scalar_lea.hbm %s3, %s271
          %s274 = sshll.u32 %s263, 4
          %s275 = int_to_ptr.vmem [resolvable:$true] %s274
          %277 = dma.vmem_to_hbm [thread:$0]  %s275, 128, %s272, %s260
        $region40: #{tpu_custom_call.1} parent=31 // pred_fallthru
          _
      $region32: #{tpu_custom_call.1} parent=5 // pred_fallthru
        _
      %p278 = scmp.le.s32.totalorder 2, %s15
      // Predicated region
      $region41: #{tpu_custom_call.1} parent=5 // pred_check
        %p279 = pneg %p278
      $region42: #{tpu_custom_call.1} parent=5 // pred_check_branch
        %281 = sbr.rel (%p279) target = $region44
      $region43: #{tpu_custom_call.1} parent=5 // pred_region
        %s282 = ssub.s32 %s15, 2
        // Predicated region
        $region45: #{tpu_custom_call.1} parent=43 // pred_check
          %p283 = pneg %p112
        $region46: #{tpu_custom_call.1} parent=43 // pred_check_branch
          %285 = sbr.rel (%p283) target = $region48
        $region47: #{tpu_custom_call.1} parent=43 // pred_region
          %s286 = sand.u32 %s97, 1
          %s287 = scalar_lea.sflag [#allocation4], %s286
          %s288 = sand.u32 %s97, 1
          %s289 = smul.addr %s288, 8
          %s290 = scalar_lea.vmem [#allocation5], %s289
          %291 = dma.done %s287, 128
        $region48: #{tpu_custom_call.1} parent=43 // pred_fallthru
          _
      $region44: #{tpu_custom_call.1} parent=5 // pred_fallthru
        _
    $region6: #{tpu_custom_call.1} parent=1 // loop_footer
      %s19 = sadd.s32 1, %s15
    $region7: #{tpu_custom_call.1} parent=1 // loop_footer_branch
      %14 = sbr.rel target = $region3
    $region8: #{tpu_custom_call.1} parent=1 // loop_exit
      _
    %292 = vsyncpa [#allocation3], 1
    %s293 = scalar_lea.sflag [#allocation3], 1
    %294 = vsyncpa %s293, 1
    %295 = vsyncpa [#allocation4], 1
    %s296 = scalar_lea.sflag [#allocation4], 1
    %297 = vsyncpa %s296, 1

</llo_original>
